<compile_context>
chip_gen: v5e
topology: v5e:2x2
jax: 0.10.0
libtpu: 0.0.40
codegen_flags: <defaults>
</compile_context>

<pallas_src>
import numpy as np

import jax
import jax.numpy as jnp
from jax.experimental import pallas as pl
from jax.experimental.pallas import tpu as pltpu

HIDDEN = 128
N_GROUPS = 9                   # 9 rotation groups per row
GROUP_PAD = 16                 # groups padded 9 -> 16 sublanes
D_ROWS = 6 * GROUP_PAD         # 96 feature-major rows for the fc2 rotation head
C_ROWS = 256                   # 9 * GROUP_PAD = 144 component rows padded to 256 (aligned transpose)
TAIL = 16                      # t(3) + b(10) + gamma(1) padded to 16 lanes
EPS = 1e-12                    # torch F.normalize default eps


def _round_up(a, b):
    return (a + b - 1) // b * b


# ----------------------------------- fused kernel -----------------------------------------
def _combine_kernel(gv_ref, av_ref, w1g_ref, w1a_ref, b1_ref,
                    w2d_ref, b2d_ref, w2t_ref, b2t_ref, perm_ref,
                    q_ref, tail_ref):
    f32 = jnp.float32
    tn = gv_ref.shape[0]

    # fc1 + ReLU; concat(g, a) fused as a split-K matmul.
    h = jnp.dot(gv_ref[...], w1g_ref[...], preferred_element_type=f32)
    h = h + jnp.dot(av_ref[...], w1a_ref[...], preferred_element_type=f32)
    h = jnp.maximum(h + b1_ref[...], 0.0)                                   # (tn, 128)

    # fc2 tail head (t | b | gamma), row-major, one lane-dense store.
    tail_ref[...] = (jnp.dot(h, w2t_ref[...], preferred_element_type=f32)
                     + b2t_ref[...])                                        # (tn, 16)

    # fc2 rotation head, feature-major: d[comp*16 + grp, n] = y[n, grp*6 + comp].
    # (transpose-rhs dot_general: contract both minor dims -> no materialized transpose)
    d = jax.lax.dot_general(w2d_ref[...], h,
                            dimension_numbers=(((1,), (1,)), ((), ())),
                            preferred_element_type=f32)
    d = d + b2d_ref[...]                                                    # (96, tn)
    ax, ay, az = d[0:16, :], d[16:32, :], d[32:48, :]
    rx, ry, rz = d[48:64, :], d[64:80, :], d[80:96, :]

    eps2 = jnp.float32(EPS * EPS)
    # tx = normalize(a)    (rsqrt(max(ss, eps^2)) == 1 / max(||v||, eps))
    inv_a = jax.lax.rsqrt(jnp.maximum(ax * ax + ay * ay + az * az, eps2))
    x0, x1, x2 = ax * inv_a, ay * inv_a, az * inv_a
    # tz = normalize(tx x r)
    c0 = x1 * rz - x2 * ry
    c1 = x2 * rx - x0 * rz
    c2 = x0 * ry - x1 * rx
    inv_c = jax.lax.rsqrt(jnp.maximum(c0 * c0 + c1 * c1 + c2 * c2, eps2))
    z0, z1, z2 = c0 * inv_c, c1 * inv_c, c2 * inv_c
    # ty = tz x tx
    y0 = z1 * x2 - z2 * x1
    y1 = z2 * x0 - z0 * x2
    y2 = z0 * x1 - z1 * x0

    # Row k*16 + grp holds rotation entry k = i*3 + c of group grp (columns x=0, y=1, z=2).
    zpad = jnp.zeros((C_ROWS - 9 * GROUP_PAD, tn), f32)
    cmat = jnp.concatenate([x0, y0, z0, x1, y1, z1, x2, y2, z2, zpad], axis=0)  # (256, tn)
    # Aligned in-kernel transpose + permutation matmul -> row-major (tn, 81) with
    # column grp*9 + i*3 + c, so the caller reshape to (B, L, 9, 3, 3) is direct.
    q_ref[...] = jnp.dot(cmat.T, perm_ref[...], preferred_element_type=f32)


# --------------------------------- parameter repacking -------------------------------------
def prepare_params(w1, b1, w2, b2):
    """Repack nn.Linear weights (stored (in, out), y = x @ W + b) for the fused kernel."""
    w1g = w1[:64]                                            # g_vec half of fc1
    w1a = w1[64:]                                            # a_vec half of fc1
    b1r = b1.reshape(1, HIDDEN)

    # Rotation head of fc2: feature-major, grouped by component, groups padded 9 -> 16.
    w2q = w2[:, :54].T.reshape(N_GROUPS, 6, HIDDEN)          # [group, comp, in]
    w2q = jnp.transpose(w2q, (1, 0, 2))                      # [comp, group, in]
    w2q = jnp.pad(w2q, ((0, 0), (0, GROUP_PAD - N_GROUPS), (0, 0)))
    w2d = w2q.reshape(D_ROWS, HIDDEN)                        # (96, 128)
    b2q = jnp.pad(b2[:54].reshape(N_GROUPS, 6).T,
                  ((0, 0), (0, GROUP_PAD - N_GROUPS)))       # (6, 16)
    b2d = b2q.reshape(D_ROWS, 1)                             # (96, 1)

    # Tail head (t | b | gamma), row-major, 14 -> 16 lanes.
    w2t = jnp.pad(w2[:, 54:], ((0, 0), (0, TAIL - 14)))      # (128, 16)
    b2t = jnp.pad(b2[54:], (0, TAIL - 14)).reshape(1, TAIL)  # (1, 16)

    # Permutation matrix (256, 81): row k*16 + g  ->  column g*9 + k.
    perm = np.zeros((C_ROWS, 81), np.float32)
    for k in range(N_GROUPS):
        for g in range(N_GROUPS):
            perm[k * GROUP_PAD + g, g * N_GROUPS + k] = 1.0
    return (w1g, w1a, b1r, w2d, b2d, w2t, b2t, jnp.asarray(perm))


# ------------------------------------- forward ---------------------------------------------
@jax.jit
def combine_forward(g_vec, a_vec, params):
    w1g, w1a, b1r, w2d, b2d, w2t, b2t, perm = params
    bsz, lsz, _ = g_vec.shape
    n = bsz * lsz
    # 512-row lane-aligned tiles for large N (>=85% HBM roofline, >=2 grid steps on v7x);
    # small N gets one right-sized tile (still a multiple of 128).
    tn = min(512, _round_up(n, 128))
    n_pad = _round_up(n, tn)

    g2 = g_vec.reshape(n, 64)
    a2 = a_vec.reshape(n, 64)
    if n_pad != n:
        g2 = jnp.pad(g2, ((0, n_pad - n), (0, 0)))
        a2 = jnp.pad(a2, ((0, n_pad - n), (0, 0)))

    q, tail = pl.pallas_call(
        _combine_kernel,
        out_shape=(jax.ShapeDtypeStruct((n_pad, 81), jnp.float32),
                   jax.ShapeDtypeStruct((n_pad, TAIL), jnp.float32)),
        grid_spec=pltpu.PrefetchScalarGridSpec(
            num_scalar_prefetch=0,
            grid=(n_pad // tn,),
            in_specs=[
                pl.BlockSpec((tn, 64), lambda i: (i, 0)),           # g_vec rows
                pl.BlockSpec((tn, 64), lambda i: (i, 0)),           # a_vec rows
                pl.BlockSpec((64, HIDDEN), lambda i: (0, 0)),       # w1 (g half)
                pl.BlockSpec((64, HIDDEN), lambda i: (0, 0)),       # w1 (a half)
                pl.BlockSpec((1, HIDDEN), lambda i: (0, 0)),        # b1
                pl.BlockSpec((D_ROWS, HIDDEN), lambda i: (0, 0)),   # w2 rotation head (feature-major)
                pl.BlockSpec((D_ROWS, 1), lambda i: (0, 0)),        # b2 rotation head
                pl.BlockSpec((HIDDEN, TAIL), lambda i: (0, 0)),     # w2 tail head
                pl.BlockSpec((1, TAIL), lambda i: (0, 0)),          # b2 tail head
                pl.BlockSpec((C_ROWS, 81), lambda i: (0, 0)),       # interleave permutation
            ],
            out_specs=[
                pl.BlockSpec((tn, 81), lambda i: (i, 0)),
                pl.BlockSpec((tn, TAIL), lambda i: (i, 0)),
            ],
        ),
        compiler_params=pltpu.CompilerParams(dimension_semantics=("parallel",)),
    )(g2, a2, w1g, w1a, b1r, w2d, b2d, w2t, b2t, perm)

    q = q[:n].reshape(bsz, lsz, 9, 3, 3)
    t = tail[:n, 0:3].reshape(bsz, lsz, 3)
    b = tail[:n, 3:13].reshape(bsz, lsz, 10)
    gm = tail[:n, 13:14].reshape(bsz, lsz, 1)
    return q, t, b, gm


# ------------------------------------ reference --------------------------------------------
def reference(g_vec, a_vec, w1, b1, w2, b2):
    x = jnp.concatenate([g_vec, a_vec], axis=-1)
    x = jnp.maximum(x @ w1 + b1, 0.0)
    x = x @ w2 + b2
    bsz, lsz, _ = x.shape

    def normalize(v):
        nrm = jnp.maximum(jnp.linalg.norm(v, axis=-1, keepdims=True), EPS)
        return v / nrm

    q6 = x[..., :54].reshape(bsz * lsz * 9, 6)
    tx = normalize(q6[:, :3])
    tz = normalize(jnp.cross(tx, q6[:, 3:]))
    ty = jnp.cross(tz, tx)
    q = jnp.stack([tx, ty, tz], axis=-1).reshape(bsz, lsz, 9, 3, 3)
    return q, x[..., 54:57], x[..., 57:67], x[..., 67:68]


if __name__ == "__main__":
    key = jax.random.PRNGKey(0)
    k1, k2, k3, k4, k5, k6 = jax.random.split(key, 6)

    # fc1: Linear(128, 128); fc2: Linear(128, 68)  (stored as (in, out) so y = x @ W + b)
    w1 = jax.random.normal(k1, (HIDDEN, HIDDEN), jnp.float32) * 0.05
    b1 = jax.random.normal(k2, (HIDDEN,), jnp.float32) * 0.05
    w2 = jax.random.normal(k3, (HIDDEN, 9 * 6 + 3 + 10 + 1), jnp.float32) * 0.05
    b2 = jax.random.normal(k4, (9 * 6 + 3 + 10 + 1,), jnp.float32) * 0.05
    params = prepare_params(w1, b1, w2, b2)

    batch_size, length_size = 2, 8
    g_vec = jax.random.normal(k5, (batch_size, length_size, 64), jnp.float32)
    a_vec = jax.random.normal(k6, (batch_size, length_size, 64), jnp.float32)

    q, t, b, g = combine_forward(g_vec, a_vec, params)
    jax.block_until_ready((q, t, b, g))

    q_r, t_r, b_r, g_r = reference(g_vec, a_vec, w1, b1, w2, b2)
    assert q.shape == (batch_size, length_size, 9, 3, 3)
    assert t.shape == (batch_size, length_size, 3)
    assert b.shape == (batch_size, length_size, 10)
    assert g.shape == (batch_size, length_size, 1)
    for got, want in ((q, q_r), (t, t_r), (b, b_r), (g, g_r)):
        assert jnp.allclose(got, want, rtol=2e-3, atol=2e-4), "mismatch vs reference"

    print("KERNEL_OK")
</pallas_src>

<mosaic_0001>
module attributes {stable_mosaic.version = 11 : i64} {
  func.func @_combine_kernel(%arg0: i32, %arg1: memref<128x64xf32, #tpu.memory_space<vmem>>, %arg2: memref<128x64xf32, #tpu.memory_space<vmem>>, %arg3: memref<64x128xf32, #tpu.memory_space<vmem>>, %arg4: memref<64x128xf32, #tpu.memory_space<vmem>>, %arg5: memref<1x128xf32, #tpu.memory_space<vmem>>, %arg6: memref<96x128xf32, #tpu.memory_space<vmem>>, %arg7: memref<96x1xf32, #tpu.memory_space<vmem>>, %arg8: memref<128x16xf32, #tpu.memory_space<vmem>>, %arg9: memref<1x16xf32, #tpu.memory_space<vmem>>, %arg10: memref<256x81xf32, #tpu.memory_space<vmem>>, %arg11: memref<128x81xf32, #tpu.memory_space<vmem>>, %arg12: memref<128x16xf32, #tpu.memory_space<vmem>>) attributes {dimension_semantics = [#tpu.dimension_semantics<parallel>], iteration_bounds = array<i64: 1>, scalar_prefetch = 0 : i64, scratch_operands = 0 : i64, tpu.core_type = #tpu.core_type<tc>, window_params = [{transform_indices = @transform_0, window_bounds = array<i64: 128, 64>}, {transform_indices = @transform_1, window_bounds = array<i64: 128, 64>}, {pipeline_mode = #tpu.pipeline_mode<synchronous>, transform_indices = @transform_2, window_bounds = array<i64: 64, 128>}, {pipeline_mode = #tpu.pipeline_mode<synchronous>, transform_indices = @transform_3, window_bounds = array<i64: 64, 128>}, {pipeline_mode = #tpu.pipeline_mode<synchronous>, transform_indices = @transform_4, window_bounds = array<i64: 1, 128>}, {pipeline_mode = #tpu.pipeline_mode<synchronous>, transform_indices = @transform_5, window_bounds = array<i64: 96, 128>}, {pipeline_mode = #tpu.pipeline_mode<synchronous>, transform_indices = @transform_6, window_bounds = array<i64: 96, 1>}, {pipeline_mode = #tpu.pipeline_mode<synchronous>, transform_indices = @transform_7, window_bounds = array<i64: 128, 16>}, {pipeline_mode = #tpu.pipeline_mode<synchronous>, transform_indices = @transform_8, window_bounds = array<i64: 1, 16>}, {pipeline_mode = #tpu.pipeline_mode<synchronous>, transform_indices = @transform_9, window_bounds = array<i64: 256, 81>}, {transform_indices = @transform_10, window_bounds = array<i64: 128, 81>}, {transform_indices = @transform_11, window_bounds = array<i64: 128, 16>}]} {
    %c0 = arith.constant 0 : index
    %c0_0 = arith.constant 0 : index
    %0 = vector.load %arg1[%c0, %c0_0] : memref<128x64xf32, #tpu.memory_space<vmem>>, vector<128x64xf32>
    %c0_1 = arith.constant 0 : index
    %c0_2 = arith.constant 0 : index
    %1 = vector.load %arg3[%c0_1, %c0_2] : memref<64x128xf32, #tpu.memory_space<vmem>>, vector<64x128xf32>
    %cst = arith.constant dense<0.000000e+00> : vector<128x128xf32>
    %2 = tpu.matmul %0, %1, %cst {dimension_numbers = #tpu.dot_dimension_numbers<[1], [0], [0], [1], [0, 0, 1, 1], [], []>} : vector<128x64xf32>, vector<64x128xf32>, vector<128x128xf32> -> vector<128x128xf32>
    %c0_3 = arith.constant 0 : index
    %c0_4 = arith.constant 0 : index
    %3 = vector.load %arg2[%c0_3, %c0_4] : memref<128x64xf32, #tpu.memory_space<vmem>>, vector<128x64xf32>
    %c0_5 = arith.constant 0 : index
    %c0_6 = arith.constant 0 : index
    %4 = vector.load %arg4[%c0_5, %c0_6] : memref<64x128xf32, #tpu.memory_space<vmem>>, vector<64x128xf32>
    %cst_7 = arith.constant dense<0.000000e+00> : vector<128x128xf32>
    %5 = tpu.matmul %3, %4, %cst_7 {dimension_numbers = #tpu.dot_dimension_numbers<[1], [0], [0], [1], [0, 0, 1, 1], [], []>} : vector<128x64xf32>, vector<64x128xf32>, vector<128x128xf32> -> vector<128x128xf32>
    %6 = arith.addf %2, %5 : vector<128x128xf32>
    %c0_8 = arith.constant 0 : index
    %c0_9 = arith.constant 0 : index
    %7 = vector.load %arg5[%c0_8, %c0_9] : memref<1x128xf32, #tpu.memory_space<vmem>>, vector<1x128xf32>
    %8 = vector.broadcast %7 : vector<1x128xf32> to vector<128x128xf32>
    %9 = arith.addf %6, %8 : vector<128x128xf32>
    %cst_10 = arith.constant 0.000000e+00 : f32
    %10 = vector.broadcast %cst_10 : f32 to vector<128x128xf32>
    %11 = arith.maximumf %9, %10 : vector<128x128xf32>
    %c0_11 = arith.constant 0 : index
    %c0_12 = arith.constant 0 : index
    %12 = vector.load %arg8[%c0_11, %c0_12] : memref<128x16xf32, #tpu.memory_space<vmem>>, vector<128x16xf32>
    %cst_13 = arith.constant dense<0.000000e+00> : vector<128x16xf32>
    %13 = tpu.matmul %11, %12, %cst_13 {dimension_numbers = #tpu.dot_dimension_numbers<[1], [0], [0], [1], [0, 0, 1, 1], [], []>} : vector<128x128xf32>, vector<128x16xf32>, vector<128x16xf32> -> vector<128x16xf32>
    %c0_14 = arith.constant 0 : index
    %c0_15 = arith.constant 0 : index
    %14 = vector.load %arg9[%c0_14, %c0_15] : memref<1x16xf32, #tpu.memory_space<vmem>>, vector<1x16xf32>
    %15 = vector.broadcast %14 : vector<1x16xf32> to vector<128x16xf32>
    %16 = arith.addf %13, %15 : vector<128x16xf32>
    %c0_16 = arith.constant 0 : index
    %c0_17 = arith.constant 0 : index
    %17 = vector.load %arg12[%c0_16, %c0_17] : memref<128x16xf32, #tpu.memory_space<vmem>>, vector<128x16xf32>
    tpu.vector_store %arg12[%c0_16, %c0_17], %16 {strides = array<i32>} : memref<128x16xf32, #tpu.memory_space<vmem>>, vector<128x16xf32>,
    %c0_18 = arith.constant 0 : index
    %c0_19 = arith.constant 0 : index
    %18 = vector.load %arg6[%c0_18, %c0_19] : memref<96x128xf32, #tpu.memory_space<vmem>>, vector<96x128xf32>
    %cst_20 = arith.constant dense<0.000000e+00> : vector<96x128xf32>
    %19 = tpu.matmul %18, %11, %cst_20 {dimension_numbers = #tpu.dot_dimension_numbers<[1], [1], [0], [0], [0, 0, 1, 0], [], []>} : vector<96x128xf32>, vector<128x128xf32>, vector<96x128xf32> -> vector<96x128xf32>
    %c0_21 = arith.constant 0 : index
    %c0_22 = arith.constant 0 : index
    %20 = vector.load %arg7[%c0_21, %c0_22] : memref<96x1xf32, #tpu.memory_space<vmem>>, vector<96x1xf32>
    %21 = vector.broadcast %20 : vector<96x1xf32> to vector<96x128xf32>
    %22 = arith.addf %19, %21 : vector<96x128xf32>
    %23 = vector.extract_strided_slice %22 {offsets = [0, 0], sizes = [16, 128], strides = [1, 1]} : vector<96x128xf32> to vector<16x128xf32>
    %24 = vector.extract_strided_slice %22 {offsets = [16, 0], sizes = [16, 128], strides = [1, 1]} : vector<96x128xf32> to vector<16x128xf32>
    %25 = vector.extract_strided_slice %22 {offsets = [32, 0], sizes = [16, 128], strides = [1, 1]} : vector<96x128xf32> to vector<16x128xf32>
    %26 = vector.extract_strided_slice %22 {offsets = [48, 0], sizes = [16, 128], strides = [1, 1]} : vector<96x128xf32> to vector<16x128xf32>
    %27 = vector.extract_strided_slice %22 {offsets = [64, 0], sizes = [16, 128], strides = [1, 1]} : vector<96x128xf32> to vector<16x128xf32>
    %28 = vector.extract_strided_slice %22 {offsets = [80, 0], sizes = [16, 128], strides = [1, 1]} : vector<96x128xf32> to vector<16x128xf32>
    %29 = arith.mulf %23, %23 : vector<16x128xf32>
    %30 = arith.mulf %24, %24 : vector<16x128xf32>
    %31 = arith.addf %29, %30 : vector<16x128xf32>
    %32 = arith.mulf %25, %25 : vector<16x128xf32>
    %33 = arith.addf %31, %32 : vector<16x128xf32>
    %cst_23 = arith.constant 1.000000e-24 : f32
    %34 = vector.broadcast %cst_23 : f32 to vector<16x128xf32>
    %35 = arith.maximumf %33, %34 : vector<16x128xf32>
    %36 = math.rsqrt %35 : vector<16x128xf32>
    %37 = arith.mulf %23, %36 : vector<16x128xf32>
    %38 = arith.mulf %24, %36 : vector<16x128xf32>
    %39 = arith.mulf %25, %36 : vector<16x128xf32>
    %40 = arith.mulf %38, %28 : vector<16x128xf32>
    %41 = arith.mulf %39, %27 : vector<16x128xf32>
    %42 = arith.subf %40, %41 : vector<16x128xf32>
    %43 = arith.mulf %39, %26 : vector<16x128xf32>
    %44 = arith.mulf %37, %28 : vector<16x128xf32>
    %45 = arith.subf %43, %44 : vector<16x128xf32>
    %46 = arith.mulf %37, %27 : vector<16x128xf32>
    %47 = arith.mulf %38, %26 : vector<16x128xf32>
    %48 = arith.subf %46, %47 : vector<16x128xf32>
    %49 = arith.mulf %42, %42 : vector<16x128xf32>
    %50 = arith.mulf %45, %45 : vector<16x128xf32>
    %51 = arith.addf %49, %50 : vector<16x128xf32>
    %52 = arith.mulf %48, %48 : vector<16x128xf32>
    %53 = arith.addf %51, %52 : vector<16x128xf32>
    %cst_24 = arith.constant 1.000000e-24 : f32
    %54 = vector.broadcast %cst_24 : f32 to vector<16x128xf32>
    %55 = arith.maximumf %53, %54 : vector<16x128xf32>
    %56 = math.rsqrt %55 : vector<16x128xf32>
    %57 = arith.mulf %42, %56 : vector<16x128xf32>
    %58 = arith.mulf %45, %56 : vector<16x128xf32>
    %59 = arith.mulf %48, %56 : vector<16x128xf32>
    %60 = arith.mulf %58, %39 : vector<16x128xf32>
    %61 = arith.mulf %59, %38 : vector<16x128xf32>
    %62 = arith.subf %60, %61 : vector<16x128xf32>
    %63 = arith.mulf %59, %37 : vector<16x128xf32>
    %64 = arith.mulf %57, %39 : vector<16x128xf32>
    %65 = arith.subf %63, %64 : vector<16x128xf32>
    %66 = arith.mulf %57, %38 : vector<16x128xf32>
    %67 = arith.mulf %58, %37 : vector<16x128xf32>
    %68 = arith.subf %66, %67 : vector<16x128xf32>
    %cst_25 = arith.constant 0.000000e+00 : f32
    %69 = vector.broadcast %cst_25 : f32 to vector<112x128xf32>
    %70 = tpu.concatenate %37, %62, %57, %38, %65, %58, %39, %68, %59, %69 in 0 : vector<16x128xf32>, vector<16x128xf32>, vector<16x128xf32>, vector<16x128xf32>, vector<16x128xf32>, vector<16x128xf32>, vector<16x128xf32>, vector<16x128xf32>, vector<16x128xf32>, vector<112x128xf32> -> vector<256x128xf32>
    %71 = tpu.transpose %70, [1, 0] : vector<256x128xf32> -> vector<128x256xf32>
    %c0_26 = arith.constant 0 : index
    %c0_27 = arith.constant 0 : index
    %72 = vector.load %arg10[%c0_26, %c0_27] : memref<256x81xf32, #tpu.memory_space<vmem>>, vector<256x81xf32>
    %cst_28 = arith.constant dense<0.000000e+00> : vector<128x81xf32>
    %73 = tpu.matmul %71, %72, %cst_28 {dimension_numbers = #tpu.dot_dimension_numbers<[1], [0], [0], [1], [0, 0, 1, 1], [], []>} : vector<128x256xf32>, vector<256x81xf32>, vector<128x81xf32> -> vector<128x81xf32>
    %c0_29 = arith.constant 0 : index
    %c0_30 = arith.constant 0 : index
    %74 = vector.load %arg11[%c0_29, %c0_30] : memref<128x81xf32, #tpu.memory_space<vmem>>, vector<128x81xf32>
    tpu.vector_store %arg11[%c0_29, %c0_30], %73 {strides = array<i32>} : memref<128x81xf32, #tpu.memory_space<vmem>>, vector<128x81xf32>,
    return
  }
  func.func @transform_0(%arg0: i32) -> (i32, i32) {
    %c0_i32 = arith.constant 0 : i32
    %c0_i32_0 = arith.constant 0 : i32
    return %arg0, %c0_i32 : i32, i32
  }
  func.func @transform_1(%arg0: i32) -> (i32, i32) {
    %c0_i32 = arith.constant 0 : i32
    %c0_i32_0 = arith.constant 0 : i32
    return %arg0, %c0_i32 : i32, i32
  }
  func.func @transform_2(%arg0: i32) -> (i32, i32) {
    %c0_i32 = arith.constant 0 : i32
    %c0_i32_0 = arith.constant 0 : i32
    %c0_i32_1 = arith.constant 0 : i32
    return %c0_i32, %c0_i32_0 : i32, i32
  }
  func.func @transform_3(%arg0: i32) -> (i32, i32) {
    %c0_i32 = arith.constant 0 : i32
    %c0_i32_0 = arith.constant 0 : i32
    %c0_i32_1 = arith.constant 0 : i32
    return %c0_i32, %c0_i32_0 : i32, i32
  }
  func.func @transform_4(%arg0: i32) -> (i32, i32) {
    %c0_i32 = arith.constant 0 : i32
    %c0_i32_0 = arith.constant 0 : i32
    %c0_i32_1 = arith.constant 0 : i32
    return %c0_i32, %c0_i32_0 : i32, i32
  }
  func.func @transform_5(%arg0: i32) -> (i32, i32) {
    %c0_i32 = arith.constant 0 : i32
    %c0_i32_0 = arith.constant 0 : i32
    %c0_i32_1 = arith.constant 0 : i32
    return %c0_i32, %c0_i32_0 : i32, i32
  }
  func.func @transform_6(%arg0: i32) -> (i32, i32) {
    %c0_i32 = arith.constant 0 : i32
    %c0_i32_0 = arith.constant 0 : i32
    %c0_i32_1 = arith.constant 0 : i32
    return %c0_i32, %c0_i32_0 : i32, i32
  }
  func.func @transform_7(%arg0: i32) -> (i32, i32) {
    %c0_i32 = arith.constant 0 : i32
    %c0_i32_0 = arith.constant 0 : i32
    %c0_i32_1 = arith.constant 0 : i32
    return %c0_i32, %c0_i32_0 : i32, i32
  }
  func.func @transform_8(%arg0: i32) -> (i32, i32) {
    %c0_i32 = arith.constant 0 : i32
    %c0_i32_0 = arith.constant 0 : i32
    %c0_i32_1 = arith.constant 0 : i32
    return %c0_i32, %c0_i32_0 : i32, i32
  }
  func.func @transform_9(%arg0: i32) -> (i32, i32) {
    %c0_i32 = arith.constant 0 : i32
    %c0_i32_0 = arith.constant 0 : i32
    %c0_i32_1 = arith.constant 0 : i32
    return %c0_i32, %c0_i32_0 : i32, i32
  }
  func.func @transform_10(%arg0: i32) -> (i32, i32) {
    %c0_i32 = arith.constant 0 : i32
    %c0_i32_0 = arith.constant 0 : i32
    return %arg0, %c0_i32 : i32, i32
  }
  func.func @transform_11(%arg0: i32) -> (i32, i32) {
    %c0_i32 = arith.constant 0 : i32
    %c0_i32_0 = arith.constant 0 : i32
    return %arg0, %c0_i32 : i32, i32
  }
}

</mosaic_0001>

<llo_original>
// kernel: combine_forward.1
$region0: #{combine_forward.1}
  #allocation0 [shape = 'u32[]', space=smem, size = 0x4, offset = 0x4, fixed_abs, tag = 'smem constant byte address 0x4 - core index']
  #allocation1 [shape = 'u32[72,128]{1,0:T(1,128)}', space=vmem, size = 0x9000, scoped, tag = 'internal scratch']
  %s0 = inlined_call_operand.vmem [shape: f32[128,64], index: 0, kind: input, shape index: {}]
  %s1 = inlined_call_operand.vmem [shape: f32[128,64], index: 1, kind: input, shape index: {}]
  %s2 = inlined_call_operand.vmem [shape: f32[64,128], index: 2, kind: input, shape index: {}]
  %s3 = inlined_call_operand.vmem [shape: f32[64,128], index: 3, kind: input, shape index: {}]
  %s4 = inlined_call_operand.vmem [shape: f32[1,128], index: 4, kind: input, shape index: {}]
  %s5 = inlined_call_operand.vmem [shape: f32[96,128], index: 5, kind: input, shape index: {}]
  %s6 = inlined_call_operand.vmem [shape: f32[96,1], index: 6, kind: input, shape index: {}]
  %s7 = inlined_call_operand.vmem [shape: f32[128,16], index: 7, kind: input, shape index: {}]
  %s8 = inlined_call_operand.vmem [shape: f32[1,16], index: 8, kind: input, shape index: {}]
  %s9 = inlined_call_operand.vmem [shape: f32[256,81], index: 9, kind: input, shape index: {}]
  %s10 = inlined_call_operand.vmem [shape: f32[128,81], index: 10, kind: output, shape index: {0}]
  %s11 = inlined_call_operand.vmem [shape: f32[128,16], index: 11, kind: output, shape index: {1}]
  %12 = xla_tuple %s10, %s11
  %s13 = sld [smem:[#allocation0]]
  $region58: #{combine_forward.1} parent=0
    _
  %s15 = ssub.s32 1, %s13
  %s16 = scalar_select 0, %s15, %s13
  // Predicated region
  $region2: #{combine_forward.1} parent=0 // pred_check
    _
  $region3: #{combine_forward.1} parent=0 // pred_check_branch
    %18 = sbr.rel (0) target = $region5
  $region4: #{combine_forward.1} parent=0 // pred_region
    _
  $region5: #{combine_forward.1} parent=0 // pred_fallthru
    _
  // Predicated region
  $region6: #{combine_forward.1} parent=0 // pred_check
    _
  $region7: #{combine_forward.1} parent=0 // pred_check_branch
    %20 = sbr.rel (0) target = $region9
  $region8: #{combine_forward.1} parent=0 // pred_region
    _
  $region9: #{combine_forward.1} parent=0 // pred_fallthru
    _
  // Predicated region
  $region10: #{combine_forward.1} parent=0 // pred_check
    _
  $region11: #{combine_forward.1} parent=0 // pred_check_branch
    %22 = sbr.rel (0) target = $region13
  $region12: #{combine_forward.1} parent=0 // pred_region
    _
  $region13: #{combine_forward.1} parent=0 // pred_fallthru
    _
  // Predicated region
  $region14: #{combine_forward.1} parent=0 // pred_check
    _
  $region15: #{combine_forward.1} parent=0 // pred_check_branch
    %24 = sbr.rel (0) target = $region17
  $region16: #{combine_forward.1} parent=0 // pred_region
    _
  $region17: #{combine_forward.1} parent=0 // pred_fallthru
    _
  // Predicated region
  $region18: #{combine_forward.1} parent=0 // pred_check
    _
  $region19: #{combine_forward.1} parent=0 // pred_check_branch
    %26 = sbr.rel (0) target = $region21
  $region20: #{combine_forward.1} parent=0 // pred_region
    _
  $region21: #{combine_forward.1} parent=0 // pred_fallthru
    _
  // Predicated region
  $region22: #{combine_forward.1} parent=0 // pred_check
    _
  $region23: #{combine_forward.1} parent=0 // pred_check_branch
    %28 = sbr.rel (0) target = $region25
  $region24: #{combine_forward.1} parent=0 // pred_region
    _
  $region25: #{combine_forward.1} parent=0 // pred_fallthru
    _
  // Predicated region
  $region26: #{combine_forward.1} parent=0 // pred_check
    _
  $region27: #{combine_forward.1} parent=0 // pred_check_branch
    %30 = sbr.rel (0) target = $region29
  $region28: #{combine_forward.1} parent=0 // pred_region
    _
  $region29: #{combine_forward.1} parent=0 // pred_fallthru
    _
  // Predicated region
  $region30: #{combine_forward.1} parent=0 // pred_check
    _
  $region31: #{combine_forward.1} parent=0 // pred_check_branch
    %32 = sbr.rel (0) target = $region33
  $region32: #{combine_forward.1} parent=0 // pred_region
    _
  $region33: #{combine_forward.1} parent=0 // pred_fallthru
    _
  // Predicated region
  $region34: #{combine_forward.1} parent=0 // pred_check
    _
  $region35: #{combine_forward.1} parent=0 // pred_check_branch
    %34 = sbr.rel (0) target = $region37
  $region36: #{combine_forward.1} parent=0 // pred_region
    _
  $region37: #{combine_forward.1} parent=0 // pred_fallthru
    _
  // Predicated region
  $region38: #{combine_forward.1} parent=0 // pred_check
    _
  $region39: #{combine_forward.1} parent=0 // pred_check_branch
    %36 = sbr.rel (0) target = $region41
  $region40: #{combine_forward.1} parent=0 // pred_region
    _
  $region41: #{combine_forward.1} parent=0 // pred_fallthru
    _
  %v37 = vld [vmem:[%s0] sm:$0xff]
  %v38 = vld [vmem:[%s0 + $0x8] sm:$0xff]
  %v39 = vld [vmem:[%s0 + $0x10] sm:$0xff]
  %v40 = vld [vmem:[%s0 + $0x18] sm:$0xff]
  %v41 = vld [vmem:[%s0 + $0x20] sm:$0xff]
  %v42 = vld [vmem:[%s0 + $0x28] sm:$0xff]
  %v43 = vld [vmem:[%s0 + $0x30] sm:$0xff]
  %v44 = vld [vmem:[%s0 + $0x38] sm:$0xff]
  %v45 = vld [vmem:[%s0 + $0x40] sm:$0xff]
  %v46 = vld [vmem:[%s0 + $0x48] sm:$0xff]
  %v47 = vld [vmem:[%s0 + $0x50] sm:$0xff]
  %v48 = vld [vmem:[%s0 + $0x58] sm:$0xff]
  %v49 = vld [vmem:[%s0 + $0x60] sm:$0xff]
  %v50 = vld [vmem:[%s0 + $0x68] sm:$0xff]
  %v51 = vld [vmem:[%s0 + $0x70] sm:$0xff]
  %v52 = vld [vmem:[%s0 + $0x78] sm:$0xff]
  %v53 = vld [vmem:[%s2] sm:$0xff]
  %v54 = vld [vmem:[%s2 + $0x8] sm:$0xff]
  %v55 = vld [vmem:[%s2 + $0x10] sm:$0xff]
  %v56 = vld [vmem:[%s2 + $0x18] sm:$0xff]
  %v57 = vld [vmem:[%s2 + $0x20] sm:$0xff]
  %v58 = vld [vmem:[%s2 + $0x28] sm:$0xff]
  %v59 = vld [vmem:[%s2 + $0x30] sm:$0xff]
  %v60 = vld [vmem:[%s2 + $0x38] sm:$0xff]
  %v61 = vld [vmem:[%s1] sm:$0xff]
  %v62 = vld [vmem:[%s1 + $0x8] sm:$0xff]
  %v63 = vld [vmem:[%s1 + $0x10] sm:$0xff]
  %v64 = vld [vmem:[%s1 + $0x18] sm:$0xff]
  %v65 = vld [vmem:[%s1 + $0x20] sm:$0xff]
  %v66 = vld [vmem:[%s1 + $0x28] sm:$0xff]
  %v67 = vld [vmem:[%s1 + $0x30] sm:$0xff]
  %v68 = vld [vmem:[%s1 + $0x38] sm:$0xff]
  %v69 = vld [vmem:[%s1 + $0x40] sm:$0xff]
  %v70 = vld [vmem:[%s1 + $0x48] sm:$0xff]
  %v71 = vld [vmem:[%s1 + $0x50] sm:$0xff]
  %v72 = vld [vmem:[%s1 + $0x58] sm:$0xff]
  %v73 = vld [vmem:[%s1 + $0x60] sm:$0xff]
  %v74 = vld [vmem:[%s1 + $0x68] sm:$0xff]
  %v75 = vld [vmem:[%s1 + $0x70] sm:$0xff]
  %v76 = vld [vmem:[%s1 + $0x78] sm:$0xff]
  %v77 = vld [vmem:[%s3] sm:$0xff]
  %v78 = vld [vmem:[%s3 + $0x8] sm:$0xff]
  %v79 = vld [vmem:[%s3 + $0x10] sm:$0xff]
  %v80 = vld [vmem:[%s3 + $0x18] sm:$0xff]
  %v81 = vld [vmem:[%s3 + $0x20] sm:$0xff]
  %v82 = vld [vmem:[%s3 + $0x28] sm:$0xff]
  %v83 = vld [vmem:[%s3 + $0x30] sm:$0xff]
  %v84 = vld [vmem:[%s3 + $0x38] sm:$0xff]
  %vm85 = vcmask 523264
  %v87 = vsel %vm85, %v61, 0
  %v90 = vsel %vm85, %v62, 0
  %v93 = vsel %vm85, %v63, 0
  %v96 = vsel %vm85, %v64, 0
  %v99 = vsel %vm85, %v65, 0
  %v102 = vsel %vm85, %v66, 0
  %v105 = vsel %vm85, %v67, 0
  %v108 = vsel %vm85, %v68, 0
  %v111 = vsel %vm85, %v69, 0
  %v114 = vsel %vm85, %v70, 0
  %v117 = vsel %vm85, %v71, 0
  %v120 = vsel %vm85, %v72, 0
  %v123 = vsel %vm85, %v73, 0
  %v126 = vsel %vm85, %v74, 0
  %v129 = vsel %vm85, %v75, 0
  %v132 = vsel %vm85, %v76, 0
  %134 = vmatpush.msra.mxu0 0.0
  %135 = vmatpush.msra.mxu0 0.0
  %136 = vmatpush.msra.mxu0 0.0
  %137 = vmatpush.msra.mxu0 0.0
  %138 = vmatpush.msra.mxu0 0.0
  %139 = vmatpush.msra.mxu0 0.0
  %140 = vmatpush.msra.mxu0 0.0
  %141 = vmatpush.msra.mxu0 0.0
  %142 = vmatpush.msra.mxu0 %v84
  %143 = vmatpush.msra.mxu0 %v83
  %144 = vmatpush.msra.mxu0 %v82
  %145 = vmatpush.msra.mxu0 %v81
  %146 = vmatpush.msra.mxu0 %v80
  %147 = vmatpush.msra.mxu0 %v79
  %148 = vmatpush.msra.mxu0 %v78
  %149 = vmatpush.msra.mxu0 %v77
  %150 = vmatmul.f32.gmra.mxu0 %v87
  %v151 = vpop.f32.mrf.mxu0
  %v152 = vadd.f32 0.0, %v151
  %153 = vmatmul.f32.gmra.mxu0 %v90
  %v154 = vpop.f32.mrf.mxu0
  %v155 = vadd.f32 0.0, %v154
  %156 = vmatmul.f32.gmra.mxu0 %v93
  %v157 = vpop.f32.mrf.mxu0
  %v158 = vadd.f32 0.0, %v157
  %159 = vmatmul.f32.gmra.mxu0 %v96
  %v160 = vpop.f32.mrf.mxu0
  %v161 = vadd.f32 0.0, %v160
  %162 = vmatmul.f32.gmra.mxu0 %v99
  %v163 = vpop.f32.mrf.mxu0
  %v164 = vadd.f32 0.0, %v163
  %165 = vmatmul.f32.gmra.mxu0 %v102
  %v166 = vpop.f32.mrf.mxu0
  %v167 = vadd.f32 0.0, %v166
  %168 = vmatmul.f32.gmra.mxu0 %v105
  %v169 = vpop.f32.mrf.mxu0
  %v170 = vadd.f32 0.0, %v169
  %171 = vmatmul.f32.gmra.mxu0 %v108
  %v172 = vpop.f32.mrf.mxu0
  %v173 = vadd.f32 0.0, %v172
  %174 = vmatmul.f32.gmra.mxu0 %v111
  %v175 = vpop.f32.mrf.mxu0
  %v176 = vadd.f32 0.0, %v175
  %177 = vmatmul.f32.gmra.mxu0 %v114
  %v178 = vpop.f32.mrf.mxu0
  %v179 = vadd.f32 0.0, %v178
  %180 = vmatmul.f32.gmra.mxu0 %v117
  %v181 = vpop.f32.mrf.mxu0
  %v182 = vadd.f32 0.0, %v181
  %183 = vmatmul.f32.gmra.mxu0 %v120
  %v184 = vpop.f32.mrf.mxu0
  %v185 = vadd.f32 0.0, %v184
  %186 = vmatmul.f32.gmra.mxu0 %v123
  %v187 = vpop.f32.mrf.mxu0
  %v188 = vadd.f32 0.0, %v187
  %189 = vmatmul.f32.gmra.mxu0 %v126
  %v190 = vpop.f32.mrf.mxu0
  %v191 = vadd.f32 0.0, %v190
  %192 = vmatmul.f32.gmra.mxu0 %v129
  %v193 = vpop.f32.mrf.mxu0
  %v194 = vadd.f32 0.0, %v193
  %195 = vmatmul.f32.gmra.mxu0 %v132
  %v196 = vpop.f32.mrf.mxu0
  %v197 = vadd.f32 0.0, %v196
  %198 = vdwg.mxu0
  %v200 = vsel %vm85, %v37, 0
  %v203 = vsel %vm85, %v38, 0
  %v206 = vsel %vm85, %v39, 0
  %v209 = vsel %vm85, %v40, 0
  %v212 = vsel %vm85, %v41, 0
  %v215 = vsel %vm85, %v42, 0
  %v218 = vsel %vm85, %v43, 0
  %v221 = vsel %vm85, %v44, 0
  %v224 = vsel %vm85, %v45, 0
  %v227 = vsel %vm85, %v46, 0
  %v230 = vsel %vm85, %v47, 0
  %v233 = vsel %vm85, %v48, 0
  %v236 = vsel %vm85, %v49, 0
  %v239 = vsel %vm85, %v50, 0
  %v242 = vsel %vm85, %v51, 0
  %v245 = vsel %vm85, %v52, 0
  %247 = vmatpush.msra.mxu0 0.0
  %248 = vmatpush.msra.mxu0 0.0
  %249 = vmatpush.msra.mxu0 0.0
  %250 = vmatpush.msra.mxu0 0.0
  %251 = vmatpush.msra.mxu0 0.0
  %252 = vmatpush.msra.mxu0 0.0
  %253 = vmatpush.msra.mxu0 0.0
  %254 = vmatpush.msra.mxu0 0.0
  %255 = vmatpush.msra.mxu0 %v60
  %256 = vmatpush.msra.mxu0 %v59
  %257 = vmatpush.msra.mxu0 %v58
  %258 = vmatpush.msra.mxu0 %v57
  %259 = vmatpush.msra.mxu0 %v56
  %260 = vmatpush.msra.mxu0 %v55
  %261 = vmatpush.msra.mxu0 %v54
  %262 = vmatpush.msra.mxu0 %v53
  %263 = vmatmul.f32.gmra.mxu0 %v200
  %v264 = vpop.f32.mrf.mxu0
  %v265 = vadd.f32 %v152, %v264
  %266 = vmatmul.f32.gmra.mxu0 %v203
  %v267 = vpop.f32.mrf.mxu0
  %v268 = vadd.f32 %v155, %v267
  %269 = vmatmul.f32.gmra.mxu0 %v206
  %v270 = vpop.f32.mrf.mxu0
  %v271 = vadd.f32 %v158, %v270
  %272 = vmatmul.f32.gmra.mxu0 %v209
  %v273 = vpop.f32.mrf.mxu0
  %v274 = vadd.f32 %v161, %v273
  %275 = vmatmul.f32.gmra.mxu0 %v212
  %v276 = vpop.f32.mrf.mxu0
  %v277 = vadd.f32 %v164, %v276
  %278 = vmatmul.f32.gmra.mxu0 %v215
  %v279 = vpop.f32.mrf.mxu0
  %v280 = vadd.f32 %v167, %v279
  %281 = vmatmul.f32.gmra.mxu0 %v218
  %v282 = vpop.f32.mrf.mxu0
  %v283 = vadd.f32 %v170, %v282
  %284 = vmatmul.f32.gmra.mxu0 %v221
  %v285 = vpop.f32.mrf.mxu0
  %v286 = vadd.f32 %v173, %v285
  %287 = vmatmul.f32.gmra.mxu0 %v224
  %v288 = vpop.f32.mrf.mxu0
  %v289 = vadd.f32 %v176, %v288
  %290 = vmatmul.f32.gmra.mxu0 %v227
  %v291 = vpop.f32.mrf.mxu0
  %v292 = vadd.f32 %v179, %v291
  %293 = vmatmul.f32.gmra.mxu0 %v230
  %v294 = vpop.f32.mrf.mxu0
  %v295 = vadd.f32 %v182, %v294
  %296 = vmatmul.f32.gmra.mxu0 %v233
  %v297 = vpop.f32.mrf.mxu0
  %v298 = vadd.f32 %v185, %v297
  %299 = vmatmul.f32.gmra.mxu0 %v236
  %v300 = vpop.f32.mrf.mxu0
  %v301 = vadd.f32 %v188, %v300
  %302 = vmatmul.f32.gmra.mxu0 %v239
  %v303 = vpop.f32.mrf.mxu0
  %v304 = vadd.f32 %v191, %v303
  %305 = vmatmul.f32.gmra.mxu0 %v242
  %v306 = vpop.f32.mrf.mxu0
  %v307 = vadd.f32 %v194, %v306
  %308 = vmatmul.f32.gmra.mxu0 %v245
  %v309 = vpop.f32.mrf.mxu0
  %v310 = vadd.f32 %v197, %v309
  %311 = vdwg.mxu0
  %v312 = vld [vmem:[%s4] sm:$0x1]
  %v314 = vperm.slane %v312, 0
  %v316 = vadd.f32 %v265, %v314
  %v317 = vadd.f32 %v268, %v314
  %v318 = vadd.f32 %v271, %v314
  %v319 = vadd.f32 %v274, %v314
  %v320 = vadd.f32 %v277, %v314
  %v321 = vadd.f32 %v280, %v314
  %v322 = vadd.f32 %v283, %v314
  %v323 = vadd.f32 %v286, %v314
  %v324 = vadd.f32 %v289, %v314
  %v325 = vadd.f32 %v292, %v314
  %v326 = vadd.f32 %v295, %v314
  %v327 = vadd.f32 %v298, %v314
  %v328 = vadd.f32 %v301, %v314
  %v329 = vadd.f32 %v304, %v314
  %v330 = vadd.f32 %v307, %v314
  %v331 = vadd.f32 %v310, %v314
  %v332 = vmax.f32 %v316, 0.0
  %v333 = vmax.f32 %v317, 0.0
  %v334 = vmax.f32 %v318, 0.0
  %v335 = vmax.f32 %v319, 0.0
  %v336 = vmax.f32 %v320, 0.0
  %v337 = vmax.f32 %v321, 0.0
  %v338 = vmax.f32 %v322, 0.0
  %v339 = vmax.f32 %v323, 0.0
  %v340 = vmax.f32 %v324, 0.0
  %v341 = vmax.f32 %v325, 0.0
  %v342 = vmax.f32 %v326, 0.0
  %v343 = vmax.f32 %v327, 0.0
  %v344 = vmax.f32 %v328, 0.0
  %v345 = vmax.f32 %v329, 0.0
  %v346 = vmax.f32 %v330, 0.0
  %v347 = vmax.f32 %v331, 0.0
  %v348 = vld [vmem:[%s7] sm:$0xff]
  %v349 = vld [vmem:[%s7 + $0x8] sm:$0xff]
  %v350 = vld [vmem:[%s7 + $0x10] sm:$0xff]
  %v351 = vld [vmem:[%s7 + $0x18] sm:$0xff]
  %v352 = vld [vmem:[%s7 + $0x20] sm:$0xff]
  %v353 = vld [vmem:[%s7 + $0x28] sm:$0xff]
  %v354 = vld [vmem:[%s7 + $0x30] sm:$0xff]
  %v355 = vld [vmem:[%s7 + $0x38] sm:$0xff]
  %v356 = vld [vmem:[%s7 + $0x40] sm:$0xff]
  %v357 = vld [vmem:[%s7 + $0x48] sm:$0xff]
  %v358 = vld [vmem:[%s7 + $0x50] sm:$0xff]
  %v359 = vld [vmem:[%s7 + $0x58] sm:$0xff]
  %v360 = vld [vmem:[%s7 + $0x60] sm:$0xff]
  %v361 = vld [vmem:[%s7 + $0x68] sm:$0xff]
  %v362 = vld [vmem:[%s7 + $0x70] sm:$0xff]
  %v363 = vld [vmem:[%s7 + $0x78] sm:$0xff]
  %v364 = vld [vmem:[%s8] sm:$0x1]
  %v366 = vperm.slane %v364, 0
  %368 = vmatpush.msra.mxu0 %v363
  %369 = vmatpush.msra.mxu0 %v362
  %370 = vmatpush.msra.mxu0 %v361
  %371 = vmatpush.msra.mxu0 %v360
  %372 = vmatpush.msra.mxu0 %v359
  %373 = vmatpush.msra.mxu0 %v358
  %374 = vmatpush.msra.mxu0 %v357
  %375 = vmatpush.msra.mxu0 %v356
  %376 = vmatpush.msra.mxu0 %v355
  %377 = vmatpush.msra.mxu0 %v354
  %378 = vmatpush.msra.mxu0 %v353
  %379 = vmatpush.msra.mxu0 %v352
  %380 = vmatpush.msra.mxu0 %v351
  %381 = vmatpush.msra.mxu0 %v350
  %382 = vmatpush.msra.mxu0 %v349
  %383 = vmatpush.msra.mxu0 %v348
  %384 = vmatmul.f32.gmra.mxu0 %v332
  %v385 = vpop.f32.mrf.mxu0
  %v386 = vadd.f32 %v366, %v385
  %387 = vmatmul.f32.gmra.mxu0 %v333
  %v388 = vpop.f32.mrf.mxu0
  %v389 = vadd.f32 %v366, %v388
  %390 = vmatmul.f32.gmra.mxu0 %v334
  %v391 = vpop.f32.mrf.mxu0
  %v392 = vadd.f32 %v366, %v391
  %393 = vmatmul.f32.gmra.mxu0 %v335
  %v394 = vpop.f32.mrf.mxu0
  %v395 = vadd.f32 %v366, %v394
  %396 = vmatmul.f32.gmra.mxu0 %v336
  %v397 = vpop.f32.mrf.mxu0
  %v398 = vadd.f32 %v366, %v397
  %399 = vmatmul.f32.gmra.mxu0 %v337
  %v400 = vpop.f32.mrf.mxu0
  %v401 = vadd.f32 %v366, %v400
  %402 = vmatmul.f32.gmra.mxu0 %v338
  %v403 = vpop.f32.mrf.mxu0
  %v404 = vadd.f32 %v366, %v403
  %405 = vmatmul.f32.gmra.mxu0 %v339
  %v406 = vpop.f32.mrf.mxu0
  %v407 = vadd.f32 %v366, %v406
  %408 = vmatmul.f32.gmra.mxu0 %v340
  %v409 = vpop.f32.mrf.mxu0
  %v410 = vadd.f32 %v366, %v409
  %411 = vmatmul.f32.gmra.mxu0 %v341
  %v412 = vpop.f32.mrf.mxu0
  %v413 = vadd.f32 %v366, %v412
  %414 = vmatmul.f32.gmra.mxu0 %v342
  %v415 = vpop.f32.mrf.mxu0
  %v416 = vadd.f32 %v366, %v415
  %417 = vmatmul.f32.gmra.mxu0 %v343
  %v418 = vpop.f32.mrf.mxu0
  %v419 = vadd.f32 %v366, %v418
  %420 = vmatmul.f32.gmra.mxu0 %v344
  %v421 = vpop.f32.mrf.mxu0
  %v422 = vadd.f32 %v366, %v421
  %423 = vmatmul.f32.gmra.mxu0 %v345
  %v424 = vpop.f32.mrf.mxu0
  %v425 = vadd.f32 %v366, %v424
  %426 = vmatmul.f32.gmra.mxu0 %v346
  %v427 = vpop.f32.mrf.mxu0
  %v428 = vadd.f32 %v366, %v427
  %429 = vmatmul.f32.gmra.mxu0 %v347
  %v430 = vpop.f32.mrf.mxu0
  %v431 = vadd.f32 %v366, %v430
  %432 = vdwg.mxu0
  %vm433 = vcmask 130048
  %434 = vst.msk [vmem:[%s11] sm:$0xff] %vm433, %v386
  %435 = vst.msk [vmem:[%s11 + $0x8] sm:$0xff] %vm433, %v389
  %436 = vst.msk [vmem:[%s11 + $0x10] sm:$0xff] %vm433, %v392
  %437 = vst.msk [vmem:[%s11 + $0x18] sm:$0xff] %vm433, %v395
  %438 = vst.msk [vmem:[%s11 + $0x20] sm:$0xff] %vm433, %v398
  %439 = vst.msk [vmem:[%s11 + $0x28] sm:$0xff] %vm433, %v401
  %440 = vst.msk [vmem:[%s11 + $0x30] sm:$0xff] %vm433, %v404
  %441 = vst.msk [vmem:[%s11 + $0x38] sm:$0xff] %vm433, %v407
  %442 = vst.msk [vmem:[%s11 + $0x40] sm:$0xff] %vm433, %v410
  %443 = vst.msk [vmem:[%s11 + $0x48] sm:$0xff] %vm433, %v413
  %444 = vst.msk [vmem:[%s11 + $0x50] sm:$0xff] %vm433, %v416
  %445 = vst.msk [vmem:[%s11 + $0x58] sm:$0xff] %vm433, %v419
  %446 = vst.msk [vmem:[%s11 + $0x60] sm:$0xff] %vm433, %v422
  %447 = vst.msk [vmem:[%s11 + $0x68] sm:$0xff] %vm433, %v425
  %448 = vst.msk [vmem:[%s11 + $0x70] sm:$0xff] %vm433, %v428
  %449 = vst.msk [vmem:[%s11 + $0x78] sm:$0xff] %vm433, %v431
  %v450 = vld [vmem:[%s5] sm:$0xff]
  %v451 = vld [vmem:[%s5 + $0x8] sm:$0xff]
  %v452 = vld [vmem:[%s5 + $0x10] sm:$0xff]
  %v453 = vld [vmem:[%s5 + $0x18] sm:$0xff]
  %v454 = vld [vmem:[%s5 + $0x20] sm:$0xff]
  %v455 = vld [vmem:[%s5 + $0x28] sm:$0xff]
  %v456 = vld [vmem:[%s5 + $0x30] sm:$0xff]
  %v457 = vld [vmem:[%s5 + $0x38] sm:$0xff]
  %v458 = vld [vmem:[%s5 + $0x40] sm:$0xff]
  %v459 = vld [vmem:[%s5 + $0x48] sm:$0xff]
  %v460 = vld [vmem:[%s5 + $0x50] sm:$0xff]
  %v461 = vld [vmem:[%s5 + $0x58] sm:$0xff]
  %v462 = vld [vmem:[%s6] sm:$0xff]
  %v463 = vld [vmem:[%s6 + $0x8] sm:$0xff]
  %v464 = vld [vmem:[%s6 + $0x10] sm:$0xff]
  %v465 = vld [vmem:[%s6 + $0x18] sm:$0xff]
  %v466 = vld [vmem:[%s6 + $0x20] sm:$0xff]
  %v467 = vld [vmem:[%s6 + $0x28] sm:$0xff]
  %v468 = vld [vmem:[%s6 + $0x30] sm:$0xff]
  %v469 = vld [vmem:[%s6 + $0x38] sm:$0xff]
  %v470 = vld [vmem:[%s6 + $0x40] sm:$0xff]
  %v471 = vld [vmem:[%s6 + $0x48] sm:$0xff]
  %v472 = vld [vmem:[%s6 + $0x50] sm:$0xff]
  %v473 = vld [vmem:[%s6 + $0x58] sm:$0xff]
  %475 = vset.pattern.permute.xlu0 0
  %476 = vperm.xlu0 %475, %v462
  %v477 = vpop.permute.xlu0 %476
  %480 = vset.pattern.permute.xlu0 0
  %481 = vperm.xlu0 %480, %v463
  %v482 = vpop.permute.xlu0 %481
  %485 = vset.pattern.permute.xlu0 0
  %486 = vperm.xlu0 %485, %v464
  %v487 = vpop.permute.xlu0 %486
  %490 = vset.pattern.permute.xlu0 0
  %491 = vperm.xlu0 %490, %v465
  %v492 = vpop.permute.xlu0 %491
  %495 = vset.pattern.permute.xlu0 0
  %496 = vperm.xlu0 %495, %v466
  %v497 = vpop.permute.xlu0 %496
  %500 = vset.pattern.permute.xlu0 0
  %501 = vperm.xlu0 %500, %v467
  %v502 = vpop.permute.xlu0 %501
  %505 = vset.pattern.permute.xlu0 0
  %506 = vperm.xlu0 %505, %v468
  %v507 = vpop.permute.xlu0 %506
  %510 = vset.pattern.permute.xlu0 0
  %511 = vperm.xlu0 %510, %v469
  %v512 = vpop.permute.xlu0 %511
  %515 = vset.pattern.permute.xlu0 0
  %516 = vperm.xlu0 %515, %v470
  %v517 = vpop.permute.xlu0 %516
  %520 = vset.pattern.permute.xlu0 0
  %521 = vperm.xlu0 %520, %v471
  %v522 = vpop.permute.xlu0 %521
  %525 = vset.pattern.permute.xlu0 0
  %526 = vperm.xlu0 %525, %v472
  %v527 = vpop.permute.xlu0 %526
  %530 = vset.pattern.permute.xlu0 0
  %531 = vperm.xlu0 %530, %v473
  %v532 = vpop.permute.xlu0 %531
  %534 = vmatpush.xpose.msra.mxu0 %v347
  %535 = vmatpush.xpose.msra.mxu0 %v346
  %536 = vmatpush.xpose.msra.mxu0 %v345
  %537 = vmatpush.xpose.msra.mxu0 %v344
  %538 = vmatpush.xpose.msra.mxu0 %v343
  %539 = vmatpush.xpose.msra.mxu0 %v342
  %540 = vmatpush.xpose.msra.mxu0 %v341
  %541 = vmatpush.xpose.msra.mxu0 %v340
  %542 = vmatpush.xpose.msra.mxu0 %v339
  %543 = vmatpush.xpose.msra.mxu0 %v338
  %544 = vmatpush.xpose.msra.mxu0 %v337
  %545 = vmatpush.xpose.msra.mxu0 %v336
  %546 = vmatpush.xpose.msra.mxu0 %v335
  %547 = vmatpush.xpose.msra.mxu0 %v334
  %548 = vmatpush.xpose.msra.mxu0 %v333
  %549 = vmatpush.xpose.msra.mxu0 %v332
  %550 = vmatmul.f32.gmra.mxu0 %v450
  %v551 = vpop.f32.mrf.mxu0
  %v552 = vadd.f32 %v477, %v551
  %553 = vmatmul.f32.gmra.mxu0 %v451
  %v554 = vpop.f32.mrf.mxu0
  %v555 = vadd.f32 %v482, %v554
  %556 = vmatmul.f32.gmra.mxu0 %v452
  %v557 = vpop.f32.mrf.mxu0
  %v558 = vadd.f32 %v487, %v557
  %559 = vmatmul.f32.gmra.mxu0 %v453
  %v560 = vpop.f32.mrf.mxu0
  %v561 = vadd.f32 %v492, %v560
  %562 = vmatmul.f32.gmra.mxu0 %v454
  %v563 = vpop.f32.mrf.mxu0
  %v564 = vadd.f32 %v497, %v563
  %565 = vmatmul.f32.gmra.mxu0 %v455
  %v566 = vpop.f32.mrf.mxu0
  %v567 = vadd.f32 %v502, %v566
  %568 = vmatmul.f32.gmra.mxu0 %v456
  %v569 = vpop.f32.mrf.mxu0
  %v570 = vadd.f32 %v507, %v569
  %571 = vmatmul.f32.gmra.mxu0 %v457
  %v572 = vpop.f32.mrf.mxu0
  %v573 = vadd.f32 %v512, %v572
  %574 = vmatmul.f32.gmra.mxu0 %v458
  %v575 = vpop.f32.mrf.mxu0
  %v576 = vadd.f32 %v517, %v575
  %577 = vmatmul.f32.gmra.mxu0 %v459
  %v578 = vpop.f32.mrf.mxu0
  %v579 = vadd.f32 %v522, %v578
  %580 = vmatmul.f32.gmra.mxu0 %v460
  %v581 = vpop.f32.mrf.mxu0
  %v582 = vadd.f32 %v527, %v581
  %583 = vmatmul.f32.gmra.mxu0 %v461
  %v584 = vpop.f32.mrf.mxu0
  %v585 = vadd.f32 %v532, %v584
  %586 = vdwg.mxu0
  %v587 = vmul.f32 %v552, %v552
  %v588 = vmul.f32 %v555, %v555
  %v589 = vmul.f32 %v558, %v558
  %v590 = vmul.f32 %v561, %v561
  %v591 = vadd.f32 %v587, %v589
  %v592 = vadd.f32 %v588, %v590
  %v593 = vmul.f32 %v564, %v564
  %v594 = vmul.f32 %v567, %v567
  %v595 = vadd.f32 %v591, %v593
  %v596 = vadd.f32 %v592, %v594
  %v597 = vmax.f32 %v595, 1e-24
  %v598 = vmax.f32 %v596, 1e-24
  %v599 = vrsqrt.pop %v597
  %v600 = vmul.f32 %v599, %v597
  %v601 = vmul.f32 %v600, %v599
  %v602 = vmul.f32 0.5, %v601
  %v603 = vsub.f32 1.5, %v602
  %v604 = vmul.f32 %v599, %v603
  %vm605 = vweird.f32 %v597
  %vm606 = vweird.f32 %v599
  %vm607 = vmor %vm605, %vm606
  %v608 = vsel %vm607, %v599, %v604
  %v609 = vrsqrt.pop %v598
  %v610 = vmul.f32 %v609, %v598
  %v611 = vmul.f32 %v610, %v609
  %v612 = vmul.f32 0.5, %v611
  %v613 = vsub.f32 1.5, %v612
  %v614 = vmul.f32 %v609, %v613
  %vm615 = vweird.f32 %v598
  %vm616 = vweird.f32 %v609
  %vm617 = vmor %vm615, %vm616
  %v618 = vsel %vm617, %v609, %v614
  %v619 = vmul.f32 %v552, %v608
  %v620 = vmul.f32 %v555, %v618
  %v621 = vmul.f32 %v558, %v608
  %v622 = vmul.f32 %v561, %v618
  %v623 = vmul.f32 %v564, %v608
  %v624 = vmul.f32 %v567, %v618
  %v625 = vmul.f32 %v621, %v582
  %v626 = vmul.f32 %v622, %v585
  %v627 = vmul.f32 %v623, %v576
  %v628 = vmul.f32 %v624, %v579
  %v629 = vsub.f32 %v625, %v627
  %v630 = vsub.f32 %v626, %v628
  %v631 = vmul.f32 %v623, %v570
  %v632 = vmul.f32 %v624, %v573
  %v633 = vmul.f32 %v619, %v582
  %v634 = vmul.f32 %v620, %v585
  %v635 = vsub.f32 %v631, %v633
  %v636 = vsub.f32 %v632, %v634
  %v637 = vmul.f32 %v619, %v576
  %v638 = vmul.f32 %v620, %v579
  %v639 = vmul.f32 %v621, %v570
  %v640 = vmul.f32 %v622, %v573
  %v641 = vsub.f32 %v637, %v639
  %v642 = vsub.f32 %v638, %v640
  %v643 = vmul.f32 %v629, %v629
  %v644 = vmul.f32 %v630, %v630
  %v645 = vmul.f32 %v635, %v635
  %v646 = vmul.f32 %v636, %v636
  %v647 = vadd.f32 %v643, %v645
  %v648 = vadd.f32 %v644, %v646
  %v649 = vmul.f32 %v641, %v641
  %v650 = vmul.f32 %v642, %v642
  %v651 = vadd.f32 %v647, %v649
  %v652 = vadd.f32 %v648, %v650
  %v653 = vmax.f32 %v651, 1e-24
  %v654 = vmax.f32 %v652, 1e-24
  %v655 = vrsqrt.pop %v653
  %v656 = vmul.f32 %v655, %v653
  %v657 = vmul.f32 %v656, %v655
  %v658 = vmul.f32 0.5, %v657
  %v659 = vsub.f32 1.5, %v658
  %v660 = vmul.f32 %v655, %v659
  %vm661 = vweird.f32 %v653
  %vm662 = vweird.f32 %v655
  %vm663 = vmor %vm661, %vm662
  %v664 = vsel %vm663, %v655, %v660
  %v665 = vrsqrt.pop %v654
  %v666 = vmul.f32 %v665, %v654
  %v667 = vmul.f32 %v666, %v665
  %v668 = vmul.f32 0.5, %v667
  %v669 = vsub.f32 1.5, %v668
  %v670 = vmul.f32 %v665, %v669
  %vm671 = vweird.f32 %v654
  %vm672 = vweird.f32 %v665
  %vm673 = vmor %vm671, %vm672
  %v674 = vsel %vm673, %v665, %v670
  %v675 = vmul.f32 %v629, %v664
  %v676 = vmul.f32 %v630, %v674
  %v677 = vmul.f32 %v635, %v664
  %v678 = vmul.f32 %v636, %v674
  %v679 = vmul.f32 %v641, %v664
  %v680 = vmul.f32 %v642, %v674
  %v681 = vmul.f32 %v677, %v623
  %v682 = vmul.f32 %v678, %v624
  %v683 = vmul.f32 %v679, %v621
  %v684 = vmul.f32 %v680, %v622
  %v685 = vsub.f32 %v681, %v683
  %v686 = vsub.f32 %v682, %v684
  %v687 = vmul.f32 %v679, %v619
  %v688 = vmul.f32 %v680, %v620
  %v689 = vmul.f32 %v675, %v623
  %v690 = vmul.f32 %v676, %v624
  %v691 = vsub.f32 %v687, %v689
  %v692 = vsub.f32 %v688, %v690
  %v693 = vmul.f32 %v675, %v621
  %v694 = vmul.f32 %v676, %v622
  %v695 = vmul.f32 %v677, %v619
  %v696 = vmul.f32 %v678, %v620
  %v697 = vsub.f32 %v693, %v695
  %v698 = vsub.f32 %v694, %v696
  %699 = vxpose.xlu0.b32.start [1/16] %v619, 128
  %700 = vxpose.xlu0.b32.cont [2/16] %v620, 128
  %701 = vxpose.xlu0.b32.cont [3/16] %v685, 128
  %702 = vxpose.xlu0.b32.cont [4/16] %v686, 128
  %703 = vxpose.xlu0.b32.cont [5/16] %v675, 128
  %704 = vxpose.xlu0.b32.cont [6/16] %v676, 128
  %705 = vxpose.xlu0.b32.cont [7/16] %v621, 128
  %706 = vxpose.xlu0.b32.cont [8/16] %v622, 128
  %707 = vxpose.xlu0.b32.cont [9/16] %v691, 128
  %708 = vxpose.xlu0.b32.cont [10/16] %v692, 128
  %709 = vxpose.xlu0.b32.cont [11/16] %v677, 128
  %710 = vxpose.xlu0.b32.cont [12/16] %v678, 128
  %711 = vxpose.xlu0.b32.cont [13/16] %v623, 128
  %712 = vxpose.xlu0.b32.cont [14/16] %v624, 128
  %713 = vxpose.xlu0.b32.cont [15/16] %v697, 128
  %714 = vxpose.xlu0.b32.end [16/16] %v698, 128
  %v715 = vpop.trf.xlu0
  %v716 = vpop.trf.xlu0
  %v717 = vpop.trf.xlu0
  %v718 = vpop.trf.xlu0
  %v719 = vpop.trf.xlu0
  %v720 = vpop.trf.xlu0
  %v721 = vpop.trf.xlu0
  %v722 = vpop.trf.xlu0
  %v723 = vpop.trf.xlu0
  %v724 = vpop.trf.xlu0
  %v725 = vpop.trf.xlu0
  %v726 = vpop.trf.xlu0
  %v727 = vpop.trf.xlu0
  %v728 = vpop.trf.xlu0
  %v729 = vpop.trf.xlu0
  %v730 = vpop.trf.xlu0
  %731 = vxpose.xlu0.b32.start [1/16] %v679, 128
  %732 = vxpose.xlu0.b32.cont [2/16] %v680, 128
  %733 = vxpose.xlu0.b32.cont [3/16] 0.0, 128
  %734 = vxpose.xlu0.b32.cont [4/16] 0.0, 128
  %735 = vxpose.xlu0.b32.cont [5/16] 0.0, 128
  %736 = vxpose.xlu0.b32.cont [6/16] 0.0, 128
  %737 = vxpose.xlu0.b32.cont [7/16] 0.0, 128
  %738 = vxpose.xlu0.b32.cont [8/16] 0.0, 128
  %739 = vxpose.xlu0.b32.cont [9/16] 0.0, 128
  %740 = vxpose.xlu0.b32.cont [10/16] 0.0, 128
  %741 = vxpose.xlu0.b32.cont [11/16] 0.0, 128
  %742 = vxpose.xlu0.b32.cont [12/16] 0.0, 128
  %743 = vxpose.xlu0.b32.cont [13/16] 0.0, 128
  %744 = vxpose.xlu0.b32.cont [14/16] 0.0, 128
  %745 = vxpose.xlu0.b32.cont [15/16] 0.0, 128
  %746 = vxpose.xlu0.b32.end [16/16] 0.0, 128
  %v747 = vpop.trf.xlu0
  %v748 = vpop.trf.xlu0
  %v749 = vpop.trf.xlu0
  %v750 = vpop.trf.xlu0
  %v751 = vpop.trf.xlu0
  %v752 = vpop.trf.xlu0
  %v753 = vpop.trf.xlu0
  %v754 = vpop.trf.xlu0
  %v755 = vpop.trf.xlu0
  %v756 = vpop.trf.xlu0
  %v757 = vpop.trf.xlu0
  %v758 = vpop.trf.xlu0
  %v759 = vpop.trf.xlu0
  %v760 = vpop.trf.xlu0
  %v761 = vpop.trf.xlu0
  %v762 = vpop.trf.xlu0
  %v763 = vld [vmem:[%s9] sm:$0xff]
  %v764 = vld [vmem:[%s9 + $0x8] sm:$0xff]
  %v765 = vld [vmem:[%s9 + $0x10] sm:$0xff]
  %v766 = vld [vmem:[%s9 + $0x18] sm:$0xff]
  %v767 = vld [vmem:[%s9 + $0x20] sm:$0xff]
  %v768 = vld [vmem:[%s9 + $0x28] sm:$0xff]
  %v769 = vld [vmem:[%s9 + $0x30] sm:$0xff]
  %v770 = vld [vmem:[%s9 + $0x38] sm:$0xff]
  %v771 = vld [vmem:[%s9 + $0x40] sm:$0xff]
  %v772 = vld [vmem:[%s9 + $0x48] sm:$0xff]
  %v773 = vld [vmem:[%s9 + $0x50] sm:$0xff]
  %v774 = vld [vmem:[%s9 + $0x58] sm:$0xff]
  %v775 = vld [vmem:[%s9 + $0x60] sm:$0xff]
  %v776 = vld [vmem:[%s9 + $0x68] sm:$0xff]
  %v777 = vld [vmem:[%s9 + $0x70] sm:$0xff]
  %v778 = vld [vmem:[%s9 + $0x78] sm:$0xff]
  %v779 = vld [vmem:[%s9 + $0x80] sm:$0xff]
  %v780 = vld [vmem:[%s9 + $0x88] sm:$0xff]
  %v781 = vld [vmem:[%s9 + $0x90] sm:$0xff]
  %v782 = vld [vmem:[%s9 + $0x98] sm:$0xff]
  %v783 = vld [vmem:[%s9 + $0xa0] sm:$0xff]
  %v784 = vld [vmem:[%s9 + $0xa8] sm:$0xff]
  %v785 = vld [vmem:[%s9 + $0xb0] sm:$0xff]
  %v786 = vld [vmem:[%s9 + $0xb8] sm:$0xff]
  %v787 = vld [vmem:[%s9 + $0xc0] sm:$0xff]
  %v788 = vld [vmem:[%s9 + $0xc8] sm:$0xff]
  %v789 = vld [vmem:[%s9 + $0xd0] sm:$0xff]
  %v790 = vld [vmem:[%s9 + $0xd8] sm:$0xff]
  %v791 = vld [vmem:[%s9 + $0xe0] sm:$0xff]
  %v792 = vld [vmem:[%s9 + $0xe8] sm:$0xff]
  %v793 = vld [vmem:[%s9 + $0xf0] sm:$0xff]
  %v794 = vld [vmem:[%s9 + $0xf8] sm:$0xff]
  %795 = vmatpush.msra.mxu0 %v778
  %796 = vmatpush.msra.mxu0 %v777
  %797 = vmatpush.msra.mxu0 %v776
  %798 = vmatpush.msra.mxu0 %v775
  %799 = vmatpush.msra.mxu0 %v774
  %800 = vmatpush.msra.mxu0 %v773
  %801 = vmatpush.msra.mxu0 %v772
  %802 = vmatpush.msra.mxu0 %v771
  %803 = vmatpush.msra.mxu0 %v770
  %804 = vmatpush.msra.mxu0 %v769
  %805 = vmatpush.msra.mxu0 %v768
  %806 = vmatpush.msra.mxu0 %v767
  %807 = vmatpush.msra.mxu0 %v766
  %808 = vmatpush.msra.mxu0 %v765
  %809 = vmatpush.msra.mxu0 %v764
  %810 = vmatpush.msra.mxu0 %v763
  %811 = vmatmul.f32.gmra.mxu0 %v715
  %v812 = vpop.f32.mrf.mxu0
  %v813 = vadd.f32 0.0, %v812
  %814 = vmatmul.f32.gmra.mxu0 %v716
  %v815 = vpop.f32.mrf.mxu0
  %v816 = vadd.f32 0.0, %v815
  %817 = vmatmul.f32.gmra.mxu0 %v717
  %v818 = vpop.f32.mrf.mxu0
  %v819 = vadd.f32 0.0, %v818
  %820 = vmatmul.f32.gmra.mxu0 %v718
  %v821 = vpop.f32.mrf.mxu0
  %v822 = vadd.f32 0.0, %v821
  %823 = vmatmul.f32.gmra.mxu0 %v719
  %v824 = vpop.f32.mrf.mxu0
  %v825 = vadd.f32 0.0, %v824
  %826 = vmatmul.f32.gmra.mxu0 %v720
  %v827 = vpop.f32.mrf.mxu0
  %v828 = vadd.f32 0.0, %v827
  %829 = vmatmul.f32.gmra.mxu0 %v721
  %v830 = vpop.f32.mrf.mxu0
  %v831 = vadd.f32 0.0, %v830
  %832 = vmatmul.f32.gmra.mxu0 %v722
  %v833 = vpop.f32.mrf.mxu0
  %v834 = vadd.f32 0.0, %v833
  %835 = vmatmul.f32.gmra.mxu0 %v723
  %v836 = vpop.f32.mrf.mxu0
  %v837 = vadd.f32 0.0, %v836
  %838 = vmatmul.f32.gmra.mxu0 %v724
  %v839 = vpop.f32.mrf.mxu0
  %v840 = vadd.f32 0.0, %v839
  %841 = vmatmul.f32.gmra.mxu0 %v725
  %v842 = vpop.f32.mrf.mxu0
  %v843 = vadd.f32 0.0, %v842
  %844 = vmatmul.f32.gmra.mxu0 %v726
  %v845 = vpop.f32.mrf.mxu0
  %v846 = vadd.f32 0.0, %v845
  %847 = vmatmul.f32.gmra.mxu0 %v727
  %v848 = vpop.f32.mrf.mxu0
  %v849 = vadd.f32 0.0, %v848
  %850 = vmatmul.f32.gmra.mxu0 %v728
  %v851 = vpop.f32.mrf.mxu0
  %v852 = vadd.f32 0.0, %v851
  %853 = vmatmul.f32.gmra.mxu0 %v729
  %v854 = vpop.f32.mrf.mxu0
  %v855 = vadd.f32 0.0, %v854
  %856 = vmatmul.f32.gmra.mxu0 %v730
  %v857 = vpop.f32.mrf.mxu0
  %v858 = vadd.f32 0.0, %v857
  %859 = vdwg.mxu0
  %860 = vmatpush.msra.mxu0 %v794
  %861 = vmatpush.msra.mxu0 %v793
  %862 = vmatpush.msra.mxu0 %v792
  %863 = vmatpush.msra.mxu0 %v791
  %864 = vmatpush.msra.mxu0 %v790
  %865 = vmatpush.msra.mxu0 %v789
  %866 = vmatpush.msra.mxu0 %v788
  %867 = vmatpush.msra.mxu0 %v787
  %868 = vmatpush.msra.mxu0 %v786
  %869 = vmatpush.msra.mxu0 %v785
  %870 = vmatpush.msra.mxu0 %v784
  %871 = vmatpush.msra.mxu0 %v783
  %872 = vmatpush.msra.mxu0 %v782
  %873 = vmatpush.msra.mxu0 %v781
  %874 = vmatpush.msra.mxu0 %v780
  %875 = vmatpush.msra.mxu0 %v779
  %876 = vmatmul.f32.gmra.mxu0 %v747
  %v877 = vpop.f32.mrf.mxu0
  %v878 = vadd.f32 %v813, %v877
  %879 = vmatmul.f32.gmra.mxu0 %v748
  %v880 = vpop.f32.mrf.mxu0
  %v881 = vadd.f32 %v816, %v880
  %882 = vmatmul.f32.gmra.mxu0 %v749
  %v883 = vpop.f32.mrf.mxu0
  %v884 = vadd.f32 %v819, %v883
  %885 = vmatmul.f32.gmra.mxu0 %v750
  %v886 = vpop.f32.mrf.mxu0
  %v887 = vadd.f32 %v822, %v886
  %888 = vmatmul.f32.gmra.mxu0 %v751
  %v889 = vpop.f32.mrf.mxu0
  %v890 = vadd.f32 %v825, %v889
  %891 = vmatmul.f32.gmra.mxu0 %v752
  %v892 = vpop.f32.mrf.mxu0
  %v893 = vadd.f32 %v828, %v892
  %894 = vmatmul.f32.gmra.mxu0 %v753
  %v895 = vpop.f32.mrf.mxu0
  %v896 = vadd.f32 %v831, %v895
  %897 = vmatmul.f32.gmra.mxu0 %v754
  %v898 = vpop.f32.mrf.mxu0
  %v899 = vadd.f32 %v834, %v898
  %900 = vmatmul.f32.gmra.mxu0 %v755
  %v901 = vpop.f32.mrf.mxu0
  %v902 = vadd.f32 %v837, %v901
  %903 = vmatmul.f32.gmra.mxu0 %v756
  %v904 = vpop.f32.mrf.mxu0
  %v905 = vadd.f32 %v840, %v904
  %906 = vmatmul.f32.gmra.mxu0 %v757
  %v907 = vpop.f32.mrf.mxu0
  %v908 = vadd.f32 %v843, %v907
  %909 = vmatmul.f32.gmra.mxu0 %v758
  %v910 = vpop.f32.mrf.mxu0
  %v911 = vadd.f32 %v846, %v910
  %912 = vmatmul.f32.gmra.mxu0 %v759
  %v913 = vpop.f32.mrf.mxu0
  %v914 = vadd.f32 %v849, %v913
  %915 = vmatmul.f32.gmra.mxu0 %v760
  %v916 = vpop.f32.mrf.mxu0
  %v917 = vadd.f32 %v852, %v916
  %918 = vmatmul.f32.gmra.mxu0 %v761
  %v919 = vpop.f32.mrf.mxu0
  %v920 = vadd.f32 %v855, %v919
  %921 = vmatmul.f32.gmra.mxu0 %v762
  %v922 = vpop.f32.mrf.mxu0
  %v923 = vadd.f32 %v858, %v922
  %924 = vdwg.mxu0
  %vm925 = vcmask 662528
  %926 = vst.msk [vmem:[%s10] sm:$0xff] %vm925, %v878
  %927 = vst.msk [vmem:[%s10 + $0x8] sm:$0xff] %vm925, %v881
  %928 = vst.msk [vmem:[%s10 + $0x10] sm:$0xff] %vm925, %v884
  %929 = vst.msk [vmem:[%s10 + $0x18] sm:$0xff] %vm925, %v887
  %930 = vst.msk [vmem:[%s10 + $0x20] sm:$0xff] %vm925, %v890
  %931 = vst.msk [vmem:[%s10 + $0x28] sm:$0xff] %vm925, %v893
  %932 = vst.msk [vmem:[%s10 + $0x30] sm:$0xff] %vm925, %v896
  %933 = vst.msk [vmem:[%s10 + $0x38] sm:$0xff] %vm925, %v899
  %934 = vst.msk [vmem:[%s10 + $0x40] sm:$0xff] %vm925, %v902
  %935 = vst.msk [vmem:[%s10 + $0x48] sm:$0xff] %vm925, %v905
  %936 = vst.msk [vmem:[%s10 + $0x50] sm:$0xff] %vm925, %v908
  %937 = vst.msk [vmem:[%s10 + $0x58] sm:$0xff] %vm925, %v911
  %938 = vst.msk [vmem:[%s10 + $0x60] sm:$0xff] %vm925, %v914
  %939 = vst.msk [vmem:[%s10 + $0x68] sm:$0xff] %vm925, %v917
  %940 = vst.msk [vmem:[%s10 + $0x70] sm:$0xff] %vm925, %v920
  %941 = vst.msk [vmem:[%s10 + $0x78] sm:$0xff] %vm925, %v923
  // Predicated region
  $region42: #{combine_forward.1} parent=0 // pred_check
    _
  $region43: #{combine_forward.1} parent=0 // pred_check_branch
    %943 = sbr.rel (0) target = $region45
  $region44: #{combine_forward.1} parent=0 // pred_region
    _
  $region45: #{combine_forward.1} parent=0 // pred_fallthru
    _
  // Predicated region
  $region46: #{combine_forward.1} parent=0 // pred_check
    _
  $region47: #{combine_forward.1} parent=0 // pred_check_branch
    %945 = sbr.rel (0) target = $region49
  $region48: #{combine_forward.1} parent=0 // pred_region
    _
  $region49: #{combine_forward.1} parent=0 // pred_fallthru
    _
  // Predicated region
  $region50: #{combine_forward.1} parent=0 // pred_check
    _
  $region51: #{combine_forward.1} parent=0 // pred_check_branch
    %947 = sbr.rel (0) target = $region53
  $region52: #{combine_forward.1} parent=0 // pred_region
    _
  $region53: #{combine_forward.1} parent=0 // pred_fallthru
    _
  // Predicated region
  $region54: #{combine_forward.1} parent=0 // pred_check
    _
  $region55: #{combine_forward.1} parent=0 // pred_check_branch
    %949 = sbr.rel (0) target = $region57
  $region56: #{combine_forward.1} parent=0 // pred_region
    _
  $region57: #{combine_forward.1} parent=0 // pred_fallthru
    _

</llo_original>
